<compile_context>
chip_gen: v6e
topology: v6e:2x2x1
jax: 0.10.0
libtpu: 0.0.40
codegen_flags: <defaults>
</compile_context>

<pallas_src>
import functools

import jax
import jax.numpy as jnp
from jax import lax
from jax.experimental import pallas as pl
from jax.experimental.pallas import tpu as pltpu


# Fixed module order (defines row offsets inside the packed parameter buffers).
_ORDER = ("convIn", "bnckIn",
          "conv0", "conv1",
          "bnck0", "conv2",
          "bnck1", "conv3",
          "bnck2", "conv4",
          "bnckOut", "convOut")

_DILATION = {"convIn": 1, "conv0": 2, "conv1": 4, "conv2": 6,
             "conv3": 8, "conv4": 10, "convOut": 1}

# One bf16 sublane tile per module -> every weight row-slice is tile aligned.
_ROW_STRIDE = 16


def _param_layout(C, mid):
    """Static (row_offset, cout, K) per module + packed buffer dims."""
    dims = {
        "convIn":  (C,   9 * C),
        "bnckIn":  (mid, C),
        "conv0":   (mid, 9 * mid),
        "conv1":   (mid, 9 * mid),
        "bnck0":   (mid, 2 * mid),
        "conv2":   (mid, 9 * mid),
        "bnck1":   (mid, 3 * mid),
        "conv3":   (mid, 9 * mid),
        "bnck2":   (mid, 4 * mid),
        "conv4":   (mid, 9 * mid),
        "bnckOut": (C,   5 * mid),
        "convOut": (C,   9 * C),
    }
    layout = {name: (i * _ROW_STRIDE,) + dims[name] for i, name in enumerate(_ORDER)}
    rows = _ROW_STRIDE * len(_ORDER)
    kmax = max(k for _, k in dims.values())
    return layout, rows, kmax


# ----------------------------------------------------------------------------
# Probe pltpu.roll's rotation convention once (outside jit) so the kernel's
# shift sign is correct regardless of the installed JAX version.
# ----------------------------------------------------------------------------
def _roll_probe():
    def k(x_ref, o_ref):
        o_ref[...] = pltpu.roll(x_ref[...], shift=1, axis=1)

    x = jnp.broadcast_to(jnp.arange(256, dtype=jnp.float32), (8, 256))
    y = pl.pallas_call(k, out_shape=jax.ShapeDtypeStruct((8, 256), jnp.float32))(x)
    # jnp.roll convention: out[0] == x[255] == 255.
    return bool(float(y[0, 0]) == 255.0)


# ----------------------------------------------------------------------------
# Fused kernel
# ----------------------------------------------------------------------------
def _make_ddcm_kernel(H, W, N, layout, roll_is_jnp):
    """N = lanes per grid step (= batch_elems_per_step * H * W)."""

    def kernel(x_ref, m_ref, row_ref, col_ref, w_ref, b_ref, o_ref):
        bf16 = jnp.bfloat16
        mrow = m_ref[...]          # (1, N) f32  mask, broadcast over channels
        row = row_ref[...]         # (1, N) i32  per-pixel y coordinate
        col = col_ref[...]         # (1, N) i32  per-pixel x coordinate

        # --- hoisted tap-validity masks (4 cmps + 4 ANDs per distinct dilation)
        def tap_masks(d):
            rm = {-1: row >= d, 0: None, 1: row < H - d}
            cm = {-1: col >= d, 0: None, 1: col < W - d}
            out = {}
            for dy in (-1, 0, 1):
                for dx in (-1, 0, 1):
                    r, c = rm[dy], cm[dx]
                    out[(dy, dx)] = c if r is None else (r if c is None else r & c)
            return out

        masks = {d: tap_masks(d) for d in sorted(set(_DILATION.values()))}

        def params_of(name):
            off, cout, K = layout[name]
            return w_ref[off:off + cout, 0:K], b_ref[off:off + cout, :]

        def conv3x3(a_bf, name):
            """relu(dilated 3x3 conv(a) + b) * mask as ONE MXU matmul."""
            d = _DILATION[name]
            w, b = params_of(name)              # (Cout, 9*Cin) bf16, (Cout,1) f32
            msk = masks[d]
            parts = []
            for dy in (-1, 0, 1):
                for dx in (-1, 0, 1):
                    offp = d * (dy * W + dx)    # flat source offset of this tap
                    if offp == 0:
                        s = a_bf
                    else:
                        shift = (-offp) % N if roll_is_jnp else offp % N
                        s = pltpu.roll(a_bf, shift=shift, axis=1)   # XLU, off VPU path
                    m = msk[(dy, dx)]
                    if m is not None:           # out-of-image taps -> zero padding
                        s = jnp.where(m, s, jnp.zeros_like(s))
                    parts.append(s)
            stack = jnp.concatenate(parts, axis=0)        # (9*Cin, N) bf16
            y = jnp.dot(w, stack, preferred_element_type=jnp.float32)
            return jnp.maximum(y + b, 0.0) * mrow         # f32 epilogue (v5e-safe)

        def bneck(branches_bf, name):
            """1x1 conv + bias over the (virtual) channel-concat of branches."""
            w, b = params_of(name)              # (Cout, n*Cb) bf16, (Cout,1) f32
            stack = branches_bf[0] if len(branches_bf) == 1 else \
                jnp.concatenate(branches_bf, axis=0)       # == torch.cat, on sublanes
            # TODO(synk): SConv2d assumed = conv1x1 + bias (no norm/act/mask).
            return jnp.dot(w, stack, preferred_element_type=jnp.float32) + b

        # ----- DDCM dataflow; every feature map is cast to bf16 exactly once.
        x_bf = x_ref[...].astype(bf16)                                 # (C, N)
        h = conv3x3(x_bf, "convIn").astype(bf16)
        z = bneck([h], "bnckIn").astype(bf16)
        f0 = conv3x3(z, "conv0").astype(bf16)
        f1 = conv3x3(f0, "conv1").astype(bf16)
        f2 = conv3x3(bneck([f0, f1], "bnck0").astype(bf16), "conv2").astype(bf16)
        f3 = conv3x3(bneck([f0, f1, f2], "bnck1").astype(bf16), "conv3").astype(bf16)
        f4 = conv3x3(bneck([f0, f1, f2, f3], "bnck2").astype(bf16), "conv4").astype(bf16)
        out = conv3x3(bneck([f0, f1, f2, f3, f4], "bnckOut").astype(bf16), "convOut")
        o_ref[...] = out.astype(o_ref.dtype)                           # lane-dense store

    return kernel


# ----------------------------------------------------------------------------
# Forward wrapper (NCHW in / NCHW out, matching the PyTorch module)
# ----------------------------------------------------------------------------
def ddcm_forward(params, x_nchw, mask_nchw, *, reduction, grid_steps=1,
                 roll_is_jnp=True):
    """params: {"w": packed bf16 weights, "b": packed f32 biases}."""
    B, C, H, W = x_nchw.shape
    mid = C // reduction
    S = H * W
    assert B % grid_steps == 0, "grid_steps must divide batch"
    N = (B // grid_steps) * S            # lanes per grid step

    layout, rows, kmax = _param_layout(C, mid)
    wbuf, bbuf = params["w"], params["b"]
    assert wbuf.shape == (rows, kmax) and bbuf.shape == (rows, 1)
    # TODO(synk): for in_channels where 9*Cin > 128, split the merged conv K so
    # each matmul stays within one K-tile on v5e's 128x128 MXU.

    # Batch folded onto the lane axis: (B,C,H,W) -> (C, B*H*W).  Roll+mask taps
    # never leak across batch elements because any tap whose target row/col is
    # in-bounds stays inside the same batch slice; out-of-bounds taps are zeroed.
    x = jnp.transpose(x_nchw.reshape(B, C, S), (1, 0, 2)).reshape(C, B * S)
    m = mask_nchw.reshape(1, B * S).astype(jnp.float32)

    # Host-precomputed per-pixel coordinates (avoids vector int div/mod in-kernel).
    flat = jnp.arange(S, dtype=jnp.int32)
    row = jnp.tile((flat // W).reshape(1, S), (1, B))
    col = jnp.tile((flat % W).reshape(1, S), (1, B))

    # TODO(synk): for production feature-map sizes, tile B*H*W into lane strips
    # (multiples of 128, halos via the same roll+mask scheme) and keep >=2
    # parallel grid steps on v7x so both TensorCores stay busy.
    out = pl.pallas_call(
        _make_ddcm_kernel(H, W, N, layout, roll_is_jnp),
        out_shape=jax.ShapeDtypeStruct((C, B * S), x_nchw.dtype),
        grid=(grid_steps,),
        in_specs=[
            pl.BlockSpec((C, N), lambda i: (0, i)),          # activations
            pl.BlockSpec((1, N), lambda i: (0, i)),          # mask
            pl.BlockSpec((1, N), lambda i: (0, i)),          # row idx
            pl.BlockSpec((1, N), lambda i: (0, i)),          # col idx
            pl.BlockSpec((rows, kmax), lambda i: (0, 0)),    # all weights (1 DMA)
            pl.BlockSpec((rows, 1), lambda i: (0, 0)),       # all biases  (1 DMA)
        ],
        out_specs=pl.BlockSpec((C, N), lambda i: (0, i)),
        compiler_params=pltpu.CompilerParams(
            dimension_semantics=("parallel",),
            vmem_limit_bytes=32 * 1024 * 1024,               # explicit, v7x-safe
        ),
    )(x, m, row, col, wbuf, bbuf)

    return jnp.transpose(out.reshape(C, B, S), (1, 0, 2)).reshape(B, C, H, W)


# ----------------------------------------------------------------------------
# Parameter construction (PyTorch layout) + packing for the fused kernel
# ----------------------------------------------------------------------------
def make_raw_ddcm_params(key, in_channels, reduction):
    """PyTorch-layout params: conv weight (Cout, Cin, kH, kW), bias (Cout,)."""
    mid = in_channels // reduction

    def init(k, cout, cin, ksz):
        kw, kb = jax.random.split(k)
        fan_in = cin * ksz * ksz
        w = jax.random.normal(kw, (cout, cin, ksz, ksz), jnp.float32) / jnp.sqrt(fan_in)
        b = 0.01 * jax.random.normal(kb, (cout,), jnp.float32)
        return {"w": w, "b": b}

    keys = jax.random.split(key, 12)
    return {
        "convIn":  init(keys[0], in_channels, in_channels, 3),
        "conv0":   init(keys[1], mid, mid, 3),
        "conv1":   init(keys[2], mid, mid, 3),
        "conv2":   init(keys[3], mid, mid, 3),
        "conv3":   init(keys[4], mid, mid, 3),
        "conv4":   init(keys[5], mid, mid, 3),
        "convOut": init(keys[6], in_channels, in_channels, 3),
        "bnckIn":  init(keys[7], mid, in_channels, 1),
        "bnck0":   init(keys[8], mid, mid * 2, 1),
        "bnck1":   init(keys[9], mid, mid * 3, 1),
        "bnck2":   init(keys[10], mid, mid * 4, 1),
        "bnckOut": init(keys[11], in_channels, mid * 5, 1),
    }


def pack_ddcm_params(raw):
    """Pack all 12 modules into one bf16 weight buffer + one f32 bias buffer.

    3x3 convs : (Cout,Cin,3,3)   -> rows [off:off+Cout], cols [0:9*Cin]
                column order = tap-major (ky,kx), channel-minor, matching the
                in-kernel tap stack.
    1x1 bncks : (Cout,n*Cb,1,1)  -> rows [off:off+Cout], cols [0:n*Cb]
                column order = torch.cat channel order, matching the in-kernel
                branch concat.
    biases    : (Cout,)          -> (rows,1) f32 buffer at the same row offsets.
    """
    C = raw["convIn"]["w"].shape[0]
    mid = raw["bnckIn"]["w"].shape[0]
    layout, rows, kmax = _param_layout(C, mid)

    wbuf = jnp.zeros((rows, kmax), jnp.float32)
    bbuf = jnp.zeros((rows, 1), jnp.float32)
    for name in _ORDER:
        off, cout, K = layout[name]
        w, b = raw[name]["w"], raw[name]["b"]
        if w.shape[2] == 3:
            wm = jnp.transpose(w, (0, 2, 3, 1)).reshape(cout, K)   # (Cout, 9*Cin)
        else:
            wm = w.reshape(cout, K)                                # (Cout, n*Cb)
        wbuf = wbuf.at[off:off + cout, 0:K].set(wm)
        bbuf = bbuf.at[off:off + cout, 0].set(b)
    return {"w": wbuf.astype(jnp.bfloat16), "b": bbuf}


# ----------------------------------------------------------------------------
# Pure-JAX reference (f32) for a numerics sanity check
# ----------------------------------------------------------------------------
def _ddcm_reference(raw, x, mask):
    hi = lax.Precision.HIGHEST

    def conv_norm(name, a, d):
        w, b = raw[name]["w"], raw[name]["b"]
        y = lax.conv_general_dilated(
            a, w, window_strides=(1, 1), padding=((d, d), (d, d)),
            rhs_dilation=(d, d), dimension_numbers=("NCHW", "OIHW", "NCHW"),
            precision=hi)
        return jnp.maximum(y + b.reshape(1, -1, 1, 1), 0.0) * mask

    def sconv(name, a):
        w, b = raw[name]["w"], raw[name]["b"]
        y = lax.conv_general_dilated(
            a, w, window_strides=(1, 1), padding="VALID",
            dimension_numbers=("NCHW", "OIHW", "NCHW"), precision=hi)
        return y + b.reshape(1, -1, 1, 1)

    h = conv_norm("convIn", x, 1)
    z = sconv("bnckIn", h)
    f0 = conv_norm("conv0", z, 2)
    f1 = conv_norm("conv1", f0, 4)
    f2 = conv_norm("conv2", sconv("bnck0", jnp.concatenate([f0, f1], 1)), 6)
    f3 = conv_norm("conv3", sconv("bnck1", jnp.concatenate([f0, f1, f2], 1)), 8)
    f4 = conv_norm("conv4", sconv("bnck2", jnp.concatenate([f0, f1, f2, f3], 1)), 10)
    return conv_norm("convOut",
                     sconv("bnckOut", jnp.concatenate([f0, f1, f2, f3, f4], 1)), 1)


# ----------------------------------------------------------------------------
if __name__ == "__main__":
    B, C, H, W = 2, 8, 16, 16        # inChannels=8, reduction=2 -> mid=4
    REDUCTION = 2

    root = jax.random.PRNGKey(0)
    k_params, k_x, k_m = jax.random.split(root, 3)

    raw = make_raw_ddcm_params(k_params, C, REDUCTION)
    packed = pack_ddcm_params(raw)
    x = jax.random.normal(k_x, (B, C, H, W), jnp.float32)
    mask = (jax.random.uniform(k_m, (B, 1, H, W)) > 0.2).astype(jnp.float32)

    fwd = jax.jit(functools.partial(
        ddcm_forward, reduction=REDUCTION, grid_steps=1,
        roll_is_jnp=_roll_probe()))
    out = fwd(packed, x, mask)
    jax.block_until_ready(out)

    assert out.shape == (B, C, H, W), out.shape
    assert bool(jnp.all(jnp.isfinite(out)))

    # Numerics check vs. f32 reference (kernel uses bf16 MXU operands -> loose tol).
    ref = _ddcm_reference(raw, x, mask)
    max_diff = float(jnp.max(jnp.abs(out - ref)))
    max_ref = float(jnp.max(jnp.abs(ref)))
    assert max_diff <= 0.15 * max(1.0, max_ref), \
        f"mismatch vs reference: max|diff|={max_diff:.4f}, max|ref|={max_ref:.4f}"

    print("KERNEL_OK")
</pallas_src>

<mosaic_0001>
module attributes {stable_mosaic.version = 11 : i64} {
  func.func @k(%arg0: memref<8x256xf32, #tpu.memory_space<vmem>>, %arg1: memref<8x256xf32, #tpu.memory_space<vmem>>) attributes {dimension_semantics = [], scalar_prefetch = 0 : i64, scratch_operands = 0 : i64, tpu.core_type = #tpu.core_type<tc>} {
    %c0 = arith.constant 0 : index
    %c0_0 = arith.constant 0 : index
    %0 = vector.load %arg0[%c0, %c0_0] : memref<8x256xf32, #tpu.memory_space<vmem>>, vector<8x256xf32>
    %c1_i32 = arith.constant 1 : i32
    %1 = tpu.dynamic_rotate %0 by %c1_i32 dim 1 : vector<8x256xf32>, i32 -> vector<8x256xf32>
    %c0_1 = arith.constant 0 : index
    %c0_2 = arith.constant 0 : index
    %2 = vector.load %arg1[%c0_1, %c0_2] : memref<8x256xf32, #tpu.memory_space<vmem>>, vector<8x256xf32>
    tpu.vector_store %arg1[%c0_1, %c0_2], %1 {strides = array<i32>} : memref<8x256xf32, #tpu.memory_space<vmem>>, vector<8x256xf32>,
    return
  }
}

</mosaic_0001>

<llo_original>
// kernel: tpu_custom_call.1
$region0: #{tpu_custom_call.1}
  #allocation0 [shape = 'u32[]', space=smem, size = 0x4, offset = 0x4, fixed_abs, tag = 'smem constant byte address 0x4 - core index']
  #allocation1 [shape = 'u32[144,128]{1,0:T(1,128)}', space=vmem, size = 0x12000, scoped, tag = 'internal scratch']
  %s0 = inlined_call_operand.hbm [shape: f32[8,256], index: 0, kind: input, shape index: {}]
  %s1 = inlined_call_operand.hbm [shape: f32[8,256], index: 1, kind: output, shape index: {}]
  %s2 = sld [smem:[#allocation0]]
  $region18: #{tpu_custom_call.1} parent=0
    _
  %s4 = ssub.s32 1, %s2
  %s5 = scalar_select 0, %s4, %s2
  $region1: #{tpu_custom_call.1} parent=0
    #allocation2 [shape = 'u8[8192]{0}', space=vmem, size = 0x2000, scoped, tag = 'input window, operand 0, single buffered']
    #allocation3 [shape = 's32[1]{0}', space=sflag, size = 0x4, scoped, tag = 'scoped memory for tpu_custom_call.1']
    #allocation4 [shape = 's32[1]{0}', space=sflag, size = 0x4, scoped, tag = 'scoped memory for tpu_custom_call.1']
    #allocation5 [shape = 'u8[8192]{0}', space=vmem, size = 0x2000, scoped, tag = 'output window, operand 0, single buffered']
    %6 = vsyncpa [#allocation3], 0
    %7 = vsyncpa [#allocation4], 0
    // Predicated region
    $region2: #{tpu_custom_call.1} parent=1 // pred_check
      _
    $region3: #{tpu_custom_call.1} parent=1 // pred_check_branch
      %9 = sbr.rel (0) target = $region5
    $region4: #{tpu_custom_call.1} parent=1 // pred_region
      %s11 = ssub.s32 256, 256
      %12 = vsyncadd [#allocation3], %s11
      %s14 = sshll.u32 [#allocation2], 4
      %s15 = int_to_ptr.vmem [resolvable:$true] %s14
      %17 = dma.hbm_to_vmem [thread:$0]  %s0, 256, %s15, [#allocation3]
    $region5: #{tpu_custom_call.1} parent=1 // pred_fallthru
      _
    // Predicated region
    $region6: #{tpu_custom_call.1} parent=1 // pred_check
      _
    $region7: #{tpu_custom_call.1} parent=1 // pred_check_branch
      %19 = sbr.rel (0) target = $region9
    $region8: #{tpu_custom_call.1} parent=1 // pred_region
      %20 = dma.done [#allocation3], 256
    $region9: #{tpu_custom_call.1} parent=1 // pred_fallthru
      _
    %v21 = vld [vmem:[#allocation2] sm:$0xff]
    %v22 = vld [vmem:[#allocation2 + $0x8] sm:$0xff]
    %23 = vrot.lane.b32.xlu0 %v21, 1
    %v24 = vpop.permute.xlu0 %23
    %25 = vrot.lane.b32.xlu0 %v22, 1
    %v26 = vpop.permute.xlu0 %25
    %v27 = vlaneseq
    %v28 = vand.u32 %v27, 127
    %vm29 = vcmp.lt.s32.totalorder %v28, 1
    %v30 = vsel %vm29, %v24, %v26
    %v31 = vsel %vm29, %v26, %v24
    %32 = vst [vmem:[#allocation5] sm:$0xff] %v31
    %33 = vst [vmem:[#allocation5 + $0x8] sm:$0xff] %v30
    // Predicated region
    $region10: #{tpu_custom_call.1} parent=1 // pred_check
      _
    $region11: #{tpu_custom_call.1} parent=1 // pred_check_branch
      %35 = sbr.rel (0) target = $region13
    $region12: #{tpu_custom_call.1} parent=1 // pred_region
      %s37 = ssub.s32 256, 256
      %38 = vsyncadd [#allocation4], %s37
      %s40 = sshll.u32 [#allocation5], 4
      %s41 = int_to_ptr.vmem [resolvable:$true] %s40
      %43 = dma.vmem_to_hbm [thread:$0]  %s41, 256, %s1, [#allocation4]
    $region13: #{tpu_custom_call.1} parent=1 // pred_fallthru
      _
    // Predicated region
    $region14: #{tpu_custom_call.1} parent=1 // pred_check
      _
    $region15: #{tpu_custom_call.1} parent=1 // pred_check_branch
      %45 = sbr.rel (0) target = $region17
    $region16: #{tpu_custom_call.1} parent=1 // pred_region
      %46 = dma.done [#allocation4], 256
    $region17: #{tpu_custom_call.1} parent=1 // pred_fallthru
      _
    %47 = vsyncpa [#allocation3], 1
    %48 = vsyncpa [#allocation4], 1

</llo_original>
